<compile_context>
chip_gen: v6e
topology: v6e:2x2x1
jax: 0.10.0
libtpu: 0.0.40
codegen_flags: <defaults>
</compile_context>

<pallas_src>
import functools

import jax
import jax.numpy as jnp
from jax.experimental import pallas as pl
from jax.experimental.pallas import tpu as pltpu

LN_EPS = 1e-5  # torch.nn.LayerNorm default


# ----------------------------------------------------------------------------- kernels
def _layernorm_kernel(x_ref, gamma_ref, beta_ref, o_ref):
    """Plain path (no row folding): one LayerNorm row per tile row."""
    x = x_ref[...].astype(jnp.float32)
    mean = jnp.mean(x, axis=-1, keepdims=True)
    centered = x - mean
    var = jnp.mean(centered * centered, axis=-1, keepdims=True)
    y = centered * jax.lax.rsqrt(var + LN_EPS)
    o_ref[...] = (y * gamma_ref[...] + beta_ref[...]).astype(o_ref.dtype)


def _layernorm_fold_kernel(x_ref, gamma_ref, beta_ref, seg_ref, o_ref, *, inv_d):
    """Lane-dense path: each tile row holds g independent LayerNorm segments of
    width D (g*D lanes).  Per-segment sums are computed with a block-diagonal
    ones matmul on the MXU, which broadcasts each segment's sum back across its
    own D lanes (no cross-lane XLU reduction, no masked stores)."""
    x = x_ref[...].astype(jnp.float32)          # (TB, W)
    seg = seg_ref[...]                          # (W, W) block-diag ones, f32
    mean = jnp.dot(x, seg, preferred_element_type=jnp.float32) * inv_d
    centered = x - mean
    var = jnp.dot(centered * centered, seg, preferred_element_type=jnp.float32) * inv_d
    y = centered * jax.lax.rsqrt(var + LN_EPS)
    o_ref[...] = (y * gamma_ref[...] + beta_ref[...]).astype(o_ref.dtype)


# ----------------------------------------------------------------------------- sizing
def _vmem_limit_bytes():
    """Generation-aware VMEM limit (3/4 of physical, capped at 96 MiB)."""
    cap = None
    try:
        get_info = getattr(pltpu, "get_tpu_info", None)
        if get_info is not None:
            cap = getattr(get_info(), "vmem_capacity_bytes", None)
    except Exception:
        cap = None
    if not cap:
        cap = 64 * 1024 * 1024  # conservative: v7x physical VMEM per TensorCore
    return min(int(cap) * 3 // 4, 96 * 1024 * 1024)


def _pick_tile_rows(n_rows, row_width, x_itemsize, out_itemsize, vmem_limit_bytes):
    """Largest sublane-aligned row tile fitting ~80% of the VMEM limit,
    accounting for double-buffered I/O tiles and f32 intermediates, while
    keeping at least 2 grid steps when the batch allows (megacore)."""
    align = max(8, 32 // x_itemsize, 32 // out_itemsize)
    # double-buffered in+out tiles + ~4 f32 intermediates (x_f32, centered, y, mean/var bcast)
    bytes_per_row = 2 * row_width * (x_itemsize + out_itemsize) + 4 * row_width * 4
    budget = max(int(vmem_limit_bytes * 0.8) - (256 << 10), bytes_per_row * align)
    tile = (budget // bytes_per_row // align) * align
    tile = max(tile, align)
    # Keep >= 2 grid steps when possible so both v7x TensorCores get work.
    if n_rows > align:
        half = (((n_rows + 1) // 2) + align - 1) // align * align
        if half < n_rows:
            tile = min(tile, half)
    if tile >= n_rows:
        tile = n_rows  # single block equal to the full dim -> always layout-legal
    return tile


# ----------------------------------------------------------------------------- wrapper
def num_encoder(x, gamma, beta, *, tile_rows=None):
    """LayerNorm over the last axis. x: (..., D); gamma/beta: (D,)."""
    orig_shape = x.shape
    d = orig_shape[-1]
    out_dtype = x.dtype
    x2 = x.reshape(-1, d)
    b = x2.shape[0]

    # Lane-density fold: pack g rows of width D into one row of width g*D (=128
    # when fully folded).  The reshape is row-major contiguous -> free.
    g = 1
    if d < 128 and 128 % d == 0:
        g_try = 128 // d  # power of two since d | 128
        while g_try > 1 and b % g_try != 0:
            g_try //= 2
        if g_try >= 1 and b % g_try == 0:
            g = g_try
    w = g * d
    n_rows = b // g
    x_f = x2 if g == 1 else x2.reshape(n_rows, w)

    gamma_t = jnp.tile(gamma.reshape(1, d).astype(jnp.float32), (1, g))
    beta_t = jnp.tile(beta.reshape(1, d).astype(jnp.float32), (1, g))

    x_itemsize = jnp.dtype(x.dtype).itemsize
    out_itemsize = jnp.dtype(out_dtype).itemsize
    vmem_limit = _vmem_limit_bytes()
    if tile_rows is None:
        tile_rows = _pick_tile_rows(n_rows, w, x_itemsize, out_itemsize, vmem_limit)
    tile_rows = min(tile_rows, n_rows)
    grid = (pl.cdiv(n_rows, tile_rows),)

    cost = pl.CostEstimate(
        flops=8 * b * d + (4 * n_rows * w * w if g > 1 else 0),
        transcendentals=b,  # one rsqrt per LayerNorm row
        bytes_accessed=b * d * (x_itemsize + out_itemsize)
        + 2 * w * 4
        + (w * w * 4 if g > 1 else 0),
    )

    if g > 1:
        ids = jnp.arange(w, dtype=jnp.int32) // d
        seg = (ids[:, None] == ids[None, :]).astype(jnp.float32)  # block-diag ones
        kernel = functools.partial(_layernorm_fold_kernel, inv_d=1.0 / d)
        in_specs = [
            pl.BlockSpec((tile_rows, w), lambda i: (i, 0)),  # x tile
            pl.BlockSpec((1, w), lambda i: (0, 0)),          # gamma (grid-invariant)
            pl.BlockSpec((1, w), lambda i: (0, 0)),          # beta  (grid-invariant)
            pl.BlockSpec((w, w), lambda i: (0, 0)),          # block-diag ones
        ]
        args = (x_f, gamma_t, beta_t, seg)
    else:
        kernel = _layernorm_kernel
        in_specs = [
            pl.BlockSpec((tile_rows, w), lambda i: (i, 0)),
            pl.BlockSpec((1, w), lambda i: (0, 0)),
            pl.BlockSpec((1, w), lambda i: (0, 0)),
        ]
        args = (x_f, gamma_t, beta_t)

    out = pl.pallas_call(
        kernel,
        out_shape=jax.ShapeDtypeStruct((n_rows, w), out_dtype),
        grid_spec=pltpu.PrefetchScalarGridSpec(
            num_scalar_prefetch=0,
            grid=grid,
            in_specs=in_specs,
            out_specs=pl.BlockSpec((tile_rows, w), lambda i: (i, 0)),
        ),
        compiler_params=pltpu.CompilerParams(
            dimension_semantics=("parallel",),
            vmem_limit_bytes=vmem_limit,
        ),
        cost_estimate=cost,
    )(*args)

    return out.reshape(orig_shape)


# ----------------------------------------------------------------------------- reference
def reference(x, gamma, beta):
    xf = x.astype(jnp.float32)
    mean = jnp.mean(xf, axis=-1, keepdims=True)
    var = jnp.mean((xf - mean) ** 2, axis=-1, keepdims=True)
    y = (xf - mean) * jax.lax.rsqrt(var + LN_EPS)
    return (y * gamma.astype(jnp.float32) + beta.astype(jnp.float32)).astype(x.dtype)


if __name__ == "__main__":
    key = jax.random.PRNGKey(0)
    k1, k2, k3, k4, k5, k6 = jax.random.split(key, 6)

    # NumEncoder with num_features=32 (fold path: g=4 rows per 128-lane vreg).
    d = 32
    gamma = jnp.ones((d,), jnp.float32) + 0.01 * jax.random.normal(k1, (d,))
    beta = 0.01 * jax.random.normal(k2, (d,))

    # Case 1: 2-D batch, lane-dense fold, >= 2 grid steps.
    x1 = jax.random.normal(k3, (64, d), dtype=jnp.float32)
    o1 = jax.block_until_ready(num_encoder(x1, gamma, beta))
    assert o1.shape == x1.shape
    assert jnp.allclose(o1, reference(x1, gamma, beta), atol=1e-4, rtol=1e-4), "case 1"

    # Case 2: 3-D input; folded row count (13) is not a tile multiple -> ragged
    # final block handled by Pallas masking (no pad/slice in the wrapper).
    x2 = jax.random.normal(k4, (4, 13, d), dtype=jnp.float32)
    o2 = jax.block_until_ready(num_encoder(x2, gamma, beta))
    assert o2.shape == x2.shape
    assert jnp.allclose(o2, reference(x2, gamma, beta), atol=1e-4, rtol=1e-4), "case 2"

    # Case 3: feature count that does not divide 128 -> plain (non-fold) path,
    # also with a ragged final block.
    d3 = 33
    gamma3 = jnp.ones((d3,), jnp.float32) + 0.01 * jax.random.normal(k5, (d3,))
    beta3 = 0.01 * jax.random.normal(k6, (d3,))
    x3 = jax.random.normal(k3, (50, d3), dtype=jnp.float32)
    o3 = jax.block_until_ready(num_encoder(x3, gamma3, beta3))
    assert o3.shape == x3.shape
    assert jnp.allclose(o3, reference(x3, gamma3, beta3), atol=1e-4, rtol=1e-4), "case 3"

    print("KERNEL_OK")
</pallas_src>

<mosaic_0001>
module attributes {stable_mosaic.version = 11 : i64} {
  func.func @_layernorm_fold_kernel(%arg0: i32, %arg1: memref<8x128xf32, #tpu.memory_space<vmem>>, %arg2: memref<1x128xf32, #tpu.memory_space<vmem>>, %arg3: memref<1x128xf32, #tpu.memory_space<vmem>>, %arg4: memref<128x128xf32, #tpu.memory_space<vmem>>, %arg5: memref<8x128xf32, #tpu.memory_space<vmem>>) attributes {dimension_semantics = [#tpu.dimension_semantics<parallel>], iteration_bounds = array<i64: 2>, scalar_prefetch = 0 : i64, scratch_operands = 0 : i64, tpu.core_type = #tpu.core_type<tc>, window_params = [{transform_indices = @transform_0, window_bounds = array<i64: 8, 128>}, {pipeline_mode = #tpu.pipeline_mode<synchronous>, transform_indices = @transform_1, window_bounds = array<i64: 1, 128>}, {pipeline_mode = #tpu.pipeline_mode<synchronous>, transform_indices = @transform_2, window_bounds = array<i64: 1, 128>}, {pipeline_mode = #tpu.pipeline_mode<synchronous>, transform_indices = @transform_3, window_bounds = array<i64: 128, 128>}, {transform_indices = @transform_4, window_bounds = array<i64: 8, 128>}]} {
    %c0 = arith.constant 0 : index
    %c0_0 = arith.constant 0 : index
    %0 = vector.load %arg1[%c0, %c0_0] : memref<8x128xf32, #tpu.memory_space<vmem>>, vector<8x128xf32>
    %c0_1 = arith.constant 0 : index
    %c0_2 = arith.constant 0 : index
    %1 = vector.load %arg4[%c0_1, %c0_2] : memref<128x128xf32, #tpu.memory_space<vmem>>, vector<128x128xf32>
    %cst = arith.constant dense<0.000000e+00> : vector<8x128xf32>
    %2 = tpu.matmul %0, %1, %cst {dimension_numbers = #tpu.dot_dimension_numbers<[1], [0], [0], [1], [0, 0, 1, 1], [], []>} : vector<8x128xf32>, vector<128x128xf32>, vector<8x128xf32> -> vector<8x128xf32>
    %cst_3 = arith.constant 3.125000e-02 : f32
    %3 = vector.broadcast %cst_3 : f32 to vector<8x128xf32>
    %4 = arith.mulf %2, %3 : vector<8x128xf32>
    %5 = arith.subf %0, %4 : vector<8x128xf32>
    %6 = arith.mulf %5, %5 : vector<8x128xf32>
    %cst_4 = arith.constant dense<0.000000e+00> : vector<8x128xf32>
    %7 = tpu.matmul %6, %1, %cst_4 {dimension_numbers = #tpu.dot_dimension_numbers<[1], [0], [0], [1], [0, 0, 1, 1], [], []>} : vector<8x128xf32>, vector<128x128xf32>, vector<8x128xf32> -> vector<8x128xf32>
    %cst_5 = arith.constant 3.125000e-02 : f32
    %8 = vector.broadcast %cst_5 : f32 to vector<8x128xf32>
    %9 = arith.mulf %7, %8 : vector<8x128xf32>
    %cst_6 = arith.constant 9.99999974E-6 : f32
    %10 = vector.broadcast %cst_6 : f32 to vector<8x128xf32>
    %11 = arith.addf %9, %10 : vector<8x128xf32>
    %12 = math.rsqrt %11 : vector<8x128xf32>
    %13 = arith.mulf %5, %12 : vector<8x128xf32>
    %c0_7 = arith.constant 0 : index
    %c0_8 = arith.constant 0 : index
    %14 = vector.load %arg2[%c0_7, %c0_8] : memref<1x128xf32, #tpu.memory_space<vmem>>, vector<1x128xf32>
    %15 = vector.broadcast %14 : vector<1x128xf32> to vector<8x128xf32>
    %16 = arith.mulf %13, %15 : vector<8x128xf32>
    %c0_9 = arith.constant 0 : index
    %c0_10 = arith.constant 0 : index
    %17 = vector.load %arg3[%c0_9, %c0_10] : memref<1x128xf32, #tpu.memory_space<vmem>>, vector<1x128xf32>
    %18 = vector.broadcast %17 : vector<1x128xf32> to vector<8x128xf32>
    %19 = arith.addf %16, %18 : vector<8x128xf32>
    %c0_11 = arith.constant 0 : index
    %c0_12 = arith.constant 0 : index
    %20 = vector.load %arg5[%c0_11, %c0_12] : memref<8x128xf32, #tpu.memory_space<vmem>>, vector<8x128xf32>
    tpu.vector_store %arg5[%c0_11, %c0_12], %19 {strides = array<i32>} : memref<8x128xf32, #tpu.memory_space<vmem>>, vector<8x128xf32>,
    return
  }
  func.func @transform_0(%arg0: i32) -> (i32, i32) {
    %c0_i32 = arith.constant 0 : i32
    %c0_i32_0 = arith.constant 0 : i32
    return %arg0, %c0_i32 : i32, i32
  }
  func.func @transform_1(%arg0: i32) -> (i32, i32) {
    %c0_i32 = arith.constant 0 : i32
    %c0_i32_0 = arith.constant 0 : i32
    %c0_i32_1 = arith.constant 0 : i32
    return %c0_i32, %c0_i32_0 : i32, i32
  }
  func.func @transform_2(%arg0: i32) -> (i32, i32) {
    %c0_i32 = arith.constant 0 : i32
    %c0_i32_0 = arith.constant 0 : i32
    %c0_i32_1 = arith.constant 0 : i32
    return %c0_i32, %c0_i32_0 : i32, i32
  }
  func.func @transform_3(%arg0: i32) -> (i32, i32) {
    %c0_i32 = arith.constant 0 : i32
    %c0_i32_0 = arith.constant 0 : i32
    %c0_i32_1 = arith.constant 0 : i32
    return %c0_i32, %c0_i32_0 : i32, i32
  }
  func.func @transform_4(%arg0: i32) -> (i32, i32) {
    %c0_i32 = arith.constant 0 : i32
    %c0_i32_0 = arith.constant 0 : i32
    return %arg0, %c0_i32 : i32, i32
  }
}

</mosaic_0001>

<llo_original>
// kernel: tpu_custom_call.1
$region0: #{tpu_custom_call.1}
  #allocation0 [shape = 'u32[]', space=smem, size = 0x4, offset = 0x4, fixed_abs, tag = 'smem constant byte address 0x4 - core index']
  #allocation1 [shape = 'u32[144,128]{1,0:T(1,128)}', space=vmem, size = 0x12000, scoped, tag = 'internal scratch']
  %s0 = inlined_call_operand.hbm [shape: f32[16,128], index: 0, kind: input, shape index: {}]
  %s1 = inlined_call_operand.vmem [shape: f32[1,128], index: 1, kind: input, shape index: {}]
  %s2 = inlined_call_operand.vmem [shape: f32[1,128], index: 2, kind: input, shape index: {}]
  %s3 = inlined_call_operand.hbm [shape: f32[128,128], index: 3, kind: input, shape index: {}]
  %s4 = inlined_call_operand.hbm [shape: f32[16,128], index: 4, kind: output, shape index: {}]
  %s5 = sld [smem:[#allocation0]]
  $region57: #{tpu_custom_call.1} parent=0
    _
  %s7 = ssub.s32 1, %s5
  %s8 = scalar_select 0, %s7, %s5
  $region1: #{tpu_custom_call.1} parent=0
    #allocation2 [shape = 'u8[8192]{0}', space=vmem, size = 0x2000, scoped, tag = 'input window, operand 0']
    #allocation3 [shape = 's32[2]{0}', space=sflag, size = 0x8, scoped, tag = 'scoped memory for tpu_custom_call.1']
    #allocation4 [shape = 's32[2]{0}', space=sflag, size = 0x8, scoped, tag = 'scoped memory for tpu_custom_call.1']
    #allocation5 [shape = 'u8[65536]{0}', space=vmem, size = 0x10000, scoped, tag = 'input window, operand 3, single buffered']
    #allocation6 [shape = 's32[1]{0}', space=sflag, size = 0x4, scoped, tag = 'scoped memory for tpu_custom_call.1']
    #allocation7 [shape = 'u8[8192]{0}', space=vmem, size = 0x2000, scoped, tag = 'output window, operand 0']
    %9 = vsyncpa [#allocation3], 0
    %s10 = scalar_lea.sflag [#allocation3], 1
    %11 = vsyncpa %s10, 0
    %12 = vsyncpa [#allocation6], 0
    %13 = vsyncpa [#allocation4], 0
    %s14 = scalar_lea.sflag [#allocation4], 1
    %15 = vsyncpa %s14, 0
    loop: start=0, step=1, limit=4
    $region2: #{tpu_custom_call.1} parent=1 // loop_pre_header
      _
    $region3: #{tpu_custom_call.1} parent=1 // loop_header
      %s17 = sphi 0, %s21
      %p18 = scmp.ge.s32.totalorder %s17, 4
      %s27 = sphi 0, %s29
      %s30 = sphi 0, %s27
      %s31 = sphi 0, %s30
      %s47 = sphi 0, %s31
      %s51 = sphi 0, %s51
      %s53 = sphi 0, %s51
      %s54 = sphi 0, %s53
      %s68 = sphi 0, %s54
      %s72 = sphi 0, %s72
      %s74 = sphi 0, %s72
      %s75 = sphi 0, %s74
      %s89 = sphi 0, %s75
      %s93 = sphi 0, %s93
      %s95 = sphi 0, %s93
      %s96 = sphi 0, %s95
      %s110 = sphi 0, %s96
      %s116 = sphi 0, %s118
      %s119 = sphi 0, %s116
      %s120 = sphi 0, %s119
      %s136 = sphi 0, %s120
    $region4: #{tpu_custom_call.1} parent=1 // loop_header_branch
      %20 = sbr.rel (%p18) target = $region8
    $region5: #{tpu_custom_call.1} parent=1 // loop_body
      %s22 = ssub.s32 %s17, 1
      %s23 = ssub.s32 %s17, 2
      %s24 = sadd.s32 %s17, 1
      %s25 = ssub.s32 %s17, %s24
      %p26 = scmp.eq.s32.totalorder %s25, 0
      %s28 = sadd.s32 %s27, 1
      %s29 = scalar_select %p26, %s27, %s28
      %p32 = pneg %p26
      %p33 = scmp.eq.s32.totalorder %s17, 1
      %p34 = por %p32, %p33
      %p35 = scmp.ne.s32.totalorder %s27, %s30
      %p36 = scmp.eq.s32.totalorder %s17, 0
      %p37 = por %p35, %p36
      %p38 = scmp.ne.s32.totalorder %s27, %s30
      %p39 = scmp.eq.s32.totalorder %s22, 1
      %p40 = por %p38, %p39
      %p41 = scmp.ne.s32.totalorder %s30, %s31
      %p42 = scmp.eq.s32.totalorder %s22, 0
      %p43 = por %p41, %p42
      %p44 = scmp.ne.s32.totalorder %s30, %s31
      %p45 = scmp.eq.s32.totalorder %s23, 1
      %p46 = por %p44, %p45
      %p48 = scmp.ne.s32.totalorder %s31, %s47
      %p49 = scmp.eq.s32.totalorder %s23, 0
      %p50 = por %p48, %p49
      %s52 = sadd.s32 %s51, 1
      %p55 = scmp.eq.s32.totalorder %s17, 1
      %p56 = scmp.ne.s32.totalorder %s51, %s53
      %p57 = scmp.eq.s32.totalorder %s17, 0
      %p58 = por %p56, %p57
      %p59 = scmp.ne.s32.totalorder %s51, %s53
      %p60 = scmp.eq.s32.totalorder %s22, 1
      %p61 = por %p59, %p60
      %p62 = scmp.ne.s32.totalorder %s53, %s54
      %p63 = scmp.eq.s32.totalorder %s22, 0
      %p64 = por %p62, %p63
      %p65 = scmp.ne.s32.totalorder %s53, %s54
      %p66 = scmp.eq.s32.totalorder %s23, 1
      %p67 = por %p65, %p66
      %p69 = scmp.ne.s32.totalorder %s54, %s68
      %p70 = scmp.eq.s32.totalorder %s23, 0
      %p71 = por %p69, %p70
      %s73 = sadd.s32 %s72, 1
      %p76 = scmp.eq.s32.totalorder %s17, 1
      %p77 = scmp.ne.s32.totalorder %s72, %s74
      %p78 = scmp.eq.s32.totalorder %s17, 0
      %p79 = por %p77, %p78
      %p80 = scmp.ne.s32.totalorder %s72, %s74
      %p81 = scmp.eq.s32.totalorder %s22, 1
      %p82 = por %p80, %p81
      %p83 = scmp.ne.s32.totalorder %s74, %s75
      %p84 = scmp.eq.s32.totalorder %s22, 0
      %p85 = por %p83, %p84
      %p86 = scmp.ne.s32.totalorder %s74, %s75
      %p87 = scmp.eq.s32.totalorder %s23, 1
      %p88 = por %p86, %p87
      %p90 = scmp.ne.s32.totalorder %s75, %s89
      %p91 = scmp.eq.s32.totalorder %s23, 0
      %p92 = por %p90, %p91
      %s94 = sadd.s32 %s93, 1
      %p97 = scmp.eq.s32.totalorder %s17, 1
      %p98 = scmp.ne.s32.totalorder %s93, %s95
      %p99 = scmp.eq.s32.totalorder %s17, 0
      %p100 = por %p98, %p99
      %p101 = scmp.ne.s32.totalorder %s93, %s95
      %p102 = scmp.eq.s32.totalorder %s22, 1
      %p103 = por %p101, %p102
      %p104 = scmp.ne.s32.totalorder %s95, %s96
      %p105 = scmp.eq.s32.totalorder %s22, 0
      %p106 = por %p104, %p105
      %p107 = scmp.ne.s32.totalorder %s95, %s96
      %p108 = scmp.eq.s32.totalorder %s23, 1
      %p109 = por %p107, %p108
      %p111 = scmp.ne.s32.totalorder %s96, %s110
      %p112 = scmp.eq.s32.totalorder %s23, 0
      %p113 = por %p111, %p112
      %s114 = ssub.s32 %s17, %s24
      %p115 = scmp.eq.s32.totalorder %s114, 0
      %s117 = sadd.s32 %s116, 1
      %s118 = scalar_select %p115, %s116, %s117
      %p121 = pneg %p115
      %p122 = scmp.eq.s32.totalorder %s17, 1
      %p123 = por %p121, %p122
      %p124 = scmp.ne.s32.totalorder %s116, %s119
      %p125 = scmp.eq.s32.totalorder %s17, 0
      %p126 = por %p124, %p125
      %p127 = scmp.ne.s32.totalorder %s116, %s119
      %p128 = scmp.eq.s32.totalorder %s22, 1
      %p129 = por %p127, %p128
      %p130 = scmp.ne.s32.totalorder %s119, %s120
      %p131 = scmp.eq.s32.totalorder %s22, 0
      %p132 = por %p130, %p131
      %p133 = scmp.ne.s32.totalorder %s119, %s120
      %p134 = scmp.eq.s32.totalorder %s23, 1
      %p135 = por %p133, %p134
      %p137 = scmp.ne.s32.totalorder %s120, %s136
      %p138 = scmp.eq.s32.totalorder %s23, 0
      %p139 = por %p137, %p138
      %p140 = scmp.le.s32.totalorder 1, %s17
      %p141 = scmp.lt.s32.totalorder %s17, 3
      %p142 = pnand %p140, %p141
      %p143 = pneg %p142
      // Predicated region
      $region9: #{tpu_custom_call.1} parent=5 // pred_check
        _
      $region10: #{tpu_custom_call.1} parent=5 // pred_check_branch
        %145 = sbr.rel (%p142) target = $region12
      $region11: #{tpu_custom_call.1} parent=5 // pred_region
        %s146 = ssub.s32 %s17, 1
        // Predicated region
        $region13: #{tpu_custom_call.1} parent=11 // pred_check
          %p147 = pneg %p64
        $region14: #{tpu_custom_call.1} parent=11 // pred_check_branch
          %149 = sbr.rel (%p147) target = $region16
        $region15: #{tpu_custom_call.1} parent=11 // pred_region
          _
        $region16: #{tpu_custom_call.1} parent=11 // pred_fallthru
          _
        // Predicated region
        $region17: #{tpu_custom_call.1} parent=11 // pred_check
          %p150 = pneg %p85
        $region18: #{tpu_custom_call.1} parent=11 // pred_check_branch
          %152 = sbr.rel (%p150) target = $region20
        $region19: #{tpu_custom_call.1} parent=11 // pred_region
          _
        $region20: #{tpu_custom_call.1} parent=11 // pred_fallthru
          _
        // Predicated region
        $region21: #{tpu_custom_call.1} parent=11 // pred_check
          %p153 = pneg %p106
        $region22: #{tpu_custom_call.1} parent=11 // pred_check_branch
          %155 = sbr.rel (%p153) target = $region24
        $region23: #{tpu_custom_call.1} parent=11 // pred_region
          %s157 = ssub.s32 2048, 2048
          %158 = vsyncadd [#allocation6], %s157
          %s159 = sshll.u32 [#allocation5], 4
          %s160 = int_to_ptr.vmem [resolvable:$true] %s159
          %165 = dma.hbm_to_vmem [thread:$0]  %s3, 2048, %s160, [#allocation6], 128, 128, 8
        $region24: #{tpu_custom_call.1} parent=11 // pred_fallthru
          _
      $region12: #{tpu_custom_call.1} parent=5 // pred_fallthru
        _
      %p166 = scmp.lt.s32.totalorder %s17, 2
      // Predicated region
      $region25: #{tpu_custom_call.1} parent=5 // pred_check
        %p167 = pneg %p166
      $region26: #{tpu_custom_call.1} parent=5 // pred_check_branch
        %169 = sbr.rel (%p167) target = $region28
      $region27: #{tpu_custom_call.1} parent=5 // pred_region
        // Predicated region
        $region29: #{tpu_custom_call.1} parent=27 // pred_check
          %p170 = pneg %p37
        $region30: #{tpu_custom_call.1} parent=27 // pred_check_branch
          %172 = sbr.rel (%p170) target = $region32
        $region31: #{tpu_custom_call.1} parent=27 // pred_region
          %s173 = sand.u32 %s27, 1
          %s174 = scalar_lea.sflag [#allocation3], %s173
          %s175 = sand.u32 %s27, 1
          %s176 = smul.addr %s175, 8
          %s177 = scalar_lea.vmem [#allocation2], %s176
          %s179 = ssub.s32 128, 128
          %180 = vsyncadd %s174, %s179
          %s181 = smul.addr %s17, 128
          %s182 = scalar_lea.hbm %s0, %s181
          %s184 = sshll.u32 %s177, 4
          %s185 = int_to_ptr.vmem [resolvable:$true] %s184
          %187 = dma.hbm_to_vmem [thread:$0]  %s182, 128, %s185, %s174
        $region32: #{tpu_custom_call.1} parent=27 // pred_fallthru
          _
      $region28: #{tpu_custom_call.1} parent=5 // pred_fallthru
        _
      %p188 = scmp.le.s32.totalorder 1, %s17
      %p189 = scmp.lt.s32.totalorder %s17, 3
      %p190 = pnand %p188, %p189
      %p191 = pneg %p190
      // Predicated region
      $region33: #{tpu_custom_call.1} parent=5 // pred_check
        _
      $region34: #{tpu_custom_call.1} parent=5 // pred_check_branch
        %193 = sbr.rel (%p190) target = $region36
      $region35: #{tpu_custom_call.1} parent=5 // pred_region
        %s194 = ssub.s32 %s17, 1
        %s195 = sand.u32 %s30, 1
        %s196 = scalar_lea.sflag [#allocation3], %s195
        %s197 = sand.u32 %s30, 1
        %s198 = smul.addr %s197, 8
        %s199 = scalar_lea.vmem [#allocation2], %s198
        // Predicated region
        $region37: #{tpu_custom_call.1} parent=35 // pred_check
          %p200 = pneg %p43
        $region38: #{tpu_custom_call.1} parent=35 // pred_check_branch
          %202 = sbr.rel (%p200) target = $region40
        $region39: #{tpu_custom_call.1} parent=35 // pred_region
          %203 = dma.done %s196, 128
        $region40: #{tpu_custom_call.1} parent=35 // pred_fallthru
          _
        // Predicated region
        $region41: #{tpu_custom_call.1} parent=35 // pred_check
          %p204 = pneg %p106
        $region42: #{tpu_custom_call.1} parent=35 // pred_check_branch
          %206 = sbr.rel (%p204) target = $region44
        $region43: #{tpu_custom_call.1} parent=35 // pred_region
          %207 = dma.done [#allocation6], 2048
        $region44: #{tpu_custom_call.1} parent=35 // pred_fallthru
          _
        %s208 = sand.u32 %s30, 1
        %s209 = scalar_lea.sflag [#allocation3], %s208
        %s210 = sand.u32 %s30, 1
        %s211 = smul.addr %s210, 8
        %s212 = scalar_lea.vmem [#allocation2], %s211
        %p213 = pneg %p43
        %p214 = pneg %p40
        %p215 = pneg %p64
        %p216 = pneg %p61
        %p217 = pneg %p85
        %p218 = pneg %p82
        %p219 = pneg %p106
        %p220 = pneg %p103
        %p221 = pneg %p132
        %p222 = pneg %p129
        %s223 = sand.u32 %s119, 1
        %s224 = scalar_lea.sflag [#allocation4], %s223
        %s225 = sand.u32 %s119, 1
        %s226 = smul.addr %s225, 8
        %s227 = scalar_lea.vmem [#allocation7], %s226
        %v228 = vld [vmem:[%s199] sm:$0xff]
        %v229 = vld [vmem:[#allocation5] sm:$0xff]
        %v230 = vld [vmem:[#allocation5 + $0x8] sm:$0xff]
        %v231 = vld [vmem:[#allocation5 + $0x10] sm:$0xff]
        %v232 = vld [vmem:[#allocation5 + $0x18] sm:$0xff]
        %v233 = vld [vmem:[#allocation5 + $0x20] sm:$0xff]
        %v234 = vld [vmem:[#allocation5 + $0x28] sm:$0xff]
        %v235 = vld [vmem:[#allocation5 + $0x30] sm:$0xff]
        %v236 = vld [vmem:[#allocation5 + $0x38] sm:$0xff]
        %v237 = vld [vmem:[#allocation5 + $0x40] sm:$0xff]
        %v238 = vld [vmem:[#allocation5 + $0x48] sm:$0xff]
        %v239 = vld [vmem:[#allocation5 + $0x50] sm:$0xff]
        %v240 = vld [vmem:[#allocation5 + $0x58] sm:$0xff]
        %v241 = vld [vmem:[#allocation5 + $0x60] sm:$0xff]
        %v242 = vld [vmem:[#allocation5 + $0x68] sm:$0xff]
        %v243 = vld [vmem:[#allocation5 + $0x70] sm:$0xff]
        %v244 = vld [vmem:[#allocation5 + $0x78] sm:$0xff]
        %245 = vmatprep.subr.mxu0 0.0
        %246 = vmatpush1.msra.mxu0 %v244
        %247 = vmatprep.subr.mxu0 0.0
        %248 = vmatpush1.msra.mxu0 %v243
        %249 = vmatprep.subr.mxu0 0.0
        %250 = vmatpush1.msra.mxu0 %v242
        %251 = vmatprep.subr.mxu0 0.0
        %252 = vmatpush1.msra.mxu0 %v241
        %253 = vmatprep.subr.mxu0 0.0
        %254 = vmatpush1.msra.mxu0 %v240
        %255 = vmatprep.subr.mxu0 0.0
        %256 = vmatpush1.msra.mxu0 %v239
        %257 = vmatprep.subr.mxu0 0.0
        %258 = vmatpush1.msra.mxu0 %v238
        %259 = vmatprep.subr.mxu0 0.0
        %260 = vmatpush1.msra.mxu0 %v237
        %261 = vmatprep.subr.mxu0 0.0
        %262 = vmatpush1.msra.mxu0 %v236
        %263 = vmatprep.subr.mxu0 0.0
        %264 = vmatpush1.msra.mxu0 %v235
        %265 = vmatprep.subr.mxu0 0.0
        %266 = vmatpush1.msra.mxu0 %v234
        %267 = vmatprep.subr.mxu0 0.0
        %268 = vmatpush1.msra.mxu0 %v233
        %269 = vmatprep.subr.mxu0 0.0
        %270 = vmatpush1.msra.mxu0 %v232
        %271 = vmatprep.subr.mxu0 0.0
        %272 = vmatpush1.msra.mxu0 %v231
        %273 = vmatprep.subr.mxu0 0.0
        %274 = vmatpush1.msra.mxu0 %v230
        %275 = vmatprep.subr.mxu0 0.0
        %276 = vmatpush1.msra.mxu0 %v229
        %277 = vmatprep.subr.mxu0 0.0
        %278 = vmatpush2.msra.mxu0 0.0
        %279 = vmatprep.subr.mxu0 0.0
        %280 = vmatpush2.msra.mxu0 0.0
        %281 = vmatprep.subr.mxu0 0.0
        %282 = vmatpush2.msra.mxu0 0.0
        %283 = vmatprep.subr.mxu0 0.0
        %284 = vmatpush2.msra.mxu0 0.0
        %285 = vmatprep.subr.mxu0 0.0
        %286 = vmatpush2.msra.mxu0 0.0
        %287 = vmatprep.subr.mxu0 0.0
        %288 = vmatpush2.msra.mxu0 0.0
        %289 = vmatprep.subr.mxu0 0.0
        %290 = vmatpush2.msra.mxu0 0.0
        %291 = vmatprep.subr.mxu0 0.0
        %292 = vmatpush2.msra.mxu0 0.0
        %293 = vmatprep.subr.mxu0 0.0
        %294 = vmatpush2.msra.mxu0 0.0
        %295 = vmatprep.subr.mxu0 0.0
        %296 = vmatpush2.msra.mxu0 0.0
        %297 = vmatprep.subr.mxu0 0.0
        %298 = vmatpush2.msra.mxu0 0.0
        %299 = vmatprep.subr.mxu0 0.0
        %300 = vmatpush2.msra.mxu0 0.0
        %301 = vmatprep.subr.mxu0 0.0
        %302 = vmatpush2.msra.mxu0 0.0
        %303 = vmatprep.subr.mxu0 0.0
        %304 = vmatpush2.msra.mxu0 0.0
        %305 = vmatprep.subr.mxu0 0.0
        %306 = vmatpush2.msra.mxu0 0.0
        %307 = vmatprep.subr.mxu0 0.0
        %308 = vmatpush2.msra.mxu0 0.0
        %309 = vmatprep.mubr.f32.mxu0 0.0
        %310 = vmatmul.mubr.f32.gmra.mxu0 %v228
        %v311 = vpop.f32.mrf.mxu0
        %v312 = vadd.f32 0.0, %v311
        %v313 = vpop.f32.mrf.mxu0
        %314 = vdwg.mxu0
        %v315 = vmul.f32 %v312, 0.03125
        %v316 = vsub.f32 %v228, %v315
        %v317 = vmul.f32 %v316, %v316
        %318 = vmatprep.subr.mxu0 0.0
        %319 = vmatpush1.msra.mxu0 %v244
        %320 = vmatprep.subr.mxu0 0.0
        %321 = vmatpush1.msra.mxu0 %v243
        %322 = vmatprep.subr.mxu0 0.0
        %323 = vmatpush1.msra.mxu0 %v242
        %324 = vmatprep.subr.mxu0 0.0
        %325 = vmatpush1.msra.mxu0 %v241
        %326 = vmatprep.subr.mxu0 0.0
        %327 = vmatpush1.msra.mxu0 %v240
        %328 = vmatprep.subr.mxu0 0.0
        %329 = vmatpush1.msra.mxu0 %v239
        %330 = vmatprep.subr.mxu0 0.0
        %331 = vmatpush1.msra.mxu0 %v238
        %332 = vmatprep.subr.mxu0 0.0
        %333 = vmatpush1.msra.mxu0 %v237
        %334 = vmatprep.subr.mxu0 0.0
        %335 = vmatpush1.msra.mxu0 %v236
        %336 = vmatprep.subr.mxu0 0.0
        %337 = vmatpush1.msra.mxu0 %v235
        %338 = vmatprep.subr.mxu0 0.0
        %339 = vmatpush1.msra.mxu0 %v234
        %340 = vmatprep.subr.mxu0 0.0
        %341 = vmatpush1.msra.mxu0 %v233
        %342 = vmatprep.subr.mxu0 0.0
        %343 = vmatpush1.msra.mxu0 %v232
        %344 = vmatprep.subr.mxu0 0.0
        %345 = vmatpush1.msra.mxu0 %v231
        %346 = vmatprep.subr.mxu0 0.0
        %347 = vmatpush1.msra.mxu0 %v230
        %348 = vmatprep.subr.mxu0 0.0
        %349 = vmatpush1.msra.mxu0 %v229
        %350 = vmatprep.subr.mxu0 0.0
        %351 = vmatpush2.msra.mxu0 0.0
        %352 = vmatprep.subr.mxu0 0.0
        %353 = vmatpush2.msra.mxu0 0.0
        %354 = vmatprep.subr.mxu0 0.0
        %355 = vmatpush2.msra.mxu0 0.0
        %356 = vmatprep.subr.mxu0 0.0
        %357 = vmatpush2.msra.mxu0 0.0
        %358 = vmatprep.subr.mxu0 0.0
        %359 = vmatpush2.msra.mxu0 0.0
        %360 = vmatprep.subr.mxu0 0.0
        %361 = vmatpush2.msra.mxu0 0.0
        %362 = vmatprep.subr.mxu0 0.0
        %363 = vmatpush2.msra.mxu0 0.0
        %364 = vmatprep.subr.mxu0 0.0
        %365 = vmatpush2.msra.mxu0 0.0
        %366 = vmatprep.subr.mxu0 0.0
        %367 = vmatpush2.msra.mxu0 0.0
        %368 = vmatprep.subr.mxu0 0.0
        %369 = vmatpush2.msra.mxu0 0.0
        %370 = vmatprep.subr.mxu0 0.0
        %371 = vmatpush2.msra.mxu0 0.0
        %372 = vmatprep.subr.mxu0 0.0
        %373 = vmatpush2.msra.mxu0 0.0
        %374 = vmatprep.subr.mxu0 0.0
        %375 = vmatpush2.msra.mxu0 0.0
        %376 = vmatprep.subr.mxu0 0.0
        %377 = vmatpush2.msra.mxu0 0.0
        %378 = vmatprep.subr.mxu0 0.0
        %379 = vmatpush2.msra.mxu0 0.0
        %380 = vmatprep.subr.mxu0 0.0
        %381 = vmatpush2.msra.mxu0 0.0
        %382 = vmatprep.mubr.f32.mxu0 0.0
        %383 = vmatmul.mubr.f32.gmra.mxu0 %v317
        %v384 = vpop.f32.mrf.mxu0
        %v385 = vadd.f32 0.0, %v384
        %v386 = vpop.f32.mrf.mxu0
        %387 = vdwg.mxu0
        %v388 = vmul.f32 %v385, 0.03125
        %v389 = vadd.f32 %v388, 1e-05
        %v390 = vrsqrt.pop %v389
        %v391 = vmul.f32 %v316, %v390
        %v392 = vld [vmem:[%s1] sm:$0x1]
        %v394 = vlaneseq
        %v395 = vshrl.u32 %v394, 7
        %v396 = vsub.s32 0, %v395
        %v397 = vrot.slane %v392, %v396
        %v399 = vmul.f32 %v391, %v397
        %v400 = vld [vmem:[%s2] sm:$0x1]
        %v402 = vlaneseq
        %v403 = vshrl.u32 %v402, 7
        %v404 = vsub.s32 0, %v403
        %v405 = vrot.slane %v400, %v404
        %v407 = vadd.f32 %v399, %v405
        %408 = vst [vmem:[%s227] sm:$0xff] %v407
        %s409 = sand.u32 %s119, 1
        %s410 = scalar_lea.sflag [#allocation4], %s409
        %s411 = sand.u32 %s119, 1
        %s412 = smul.addr %s411, 8
        %s413 = scalar_lea.vmem [#allocation7], %s412
        // Predicated region
        $region45: #{tpu_custom_call.1} parent=35 // pred_check
          %p414 = pneg %p129
        $region46: #{tpu_custom_call.1} parent=35 // pred_check_branch
          %416 = sbr.rel (%p414) target = $region48
        $region47: #{tpu_custom_call.1} parent=35 // pred_region
          %s418 = ssub.s32 128, 128
          %419 = vsyncadd %s410, %s418
          %s420 = smul.addr %s22, 128
          %s421 = scalar_lea.hbm %s4, %s420
          %s423 = sshll.u32 %s413, 4
          %s424 = int_to_ptr.vmem [resolvable:$true] %s423
          %426 = dma.vmem_to_hbm [thread:$0]  %s424, 128, %s421, %s410
        $region48: #{tpu_custom_call.1} parent=35 // pred_fallthru
          _
      $region36: #{tpu_custom_call.1} parent=5 // pred_fallthru
        _
      %p427 = scmp.le.s32.totalorder 2, %s17
      // Predicated region
      $region49: #{tpu_custom_call.1} parent=5 // pred_check
        %p428 = pneg %p427
      $region50: #{tpu_custom_call.1} parent=5 // pred_check_branch
        %430 = sbr.rel (%p428) target = $region52
      $region51: #{tpu_custom_call.1} parent=5 // pred_region
        %s431 = ssub.s32 %s17, 2
        // Predicated region
        $region53: #{tpu_custom_call.1} parent=51 // pred_check
          %p432 = pneg %p135
        $region54: #{tpu_custom_call.1} parent=51 // pred_check_branch
          %434 = sbr.rel (%p432) target = $region56
        $region55: #{tpu_custom_call.1} parent=51 // pred_region
          %s435 = sand.u32 %s120, 1
          %s436 = scalar_lea.sflag [#allocation4], %s435
          %s437 = sand.u32 %s120, 1
          %s438 = smul.addr %s437, 8
          %s439 = scalar_lea.vmem [#allocation7], %s438
          %440 = dma.done %s436, 128
        $region56: #{tpu_custom_call.1} parent=51 // pred_fallthru
          _
      $region52: #{tpu_custom_call.1} parent=5 // pred_fallthru
        _
    $region6: #{tpu_custom_call.1} parent=1 // loop_footer
      %s21 = sadd.s32 1, %s17
    $region7: #{tpu_custom_call.1} parent=1 // loop_footer_branch
      %16 = sbr.rel target = $region3
    $region8: #{tpu_custom_call.1} parent=1 // loop_exit
      _
    %441 = vsyncpa [#allocation3], 1
    %s442 = scalar_lea.sflag [#allocation3], 1
    %443 = vsyncpa %s442, 1
    %444 = vsyncpa [#allocation6], 1
    %445 = vsyncpa [#allocation4], 1
    %s446 = scalar_lea.sflag [#allocation4], 1
    %447 = vsyncpa %s446, 1

</llo_original>
